<compile_context>
chip_gen: v5e
topology: v5e:2x2
jax: 0.10.0
libtpu: 0.0.40
codegen_flags: <defaults>
</compile_context>

<pallas_src>
import functools

import jax
import jax.numpy as jnp
from jax import lax
from jax.experimental import pallas as pl
from jax.experimental.pallas import tpu as pltpu

NUM_CLASSES = 4
REG_MAX = 7
R1 = REG_MAX + 1
EPS = 1e-10  # GIoULoss default eps


def _bbox_loss_kernel(pd_ref, pb_ref, ap_ref, lab_ref, ab_ref, bw_ref, out_ref,
                      *, L, TL):
    """One anchor tile (all batches).  Writes a (1, 4, TL) partial-sum block:
       row 0: sum |pb-ab| over positives, row 1: sum giou*w, row 2: sum dfl*w,
       row 3: positive count."""
    l = pl.program_id(0)

    labels = lab_ref[...]                                  # [B, 1, TL] int32
    pos = labels != NUM_CLASSES                            # [B, 1, TL] bool
    if L % TL != 0:
        # Ragged last tile: OOB lanes hold stale VMEM data -> mask them here
        # (everything downstream is select-masked through `pos`, NaN-safe).
        lane = lax.broadcasted_iota(jnp.int32, (1, 1, TL), 2)
        pos = jnp.logical_and(pos, lane < (L - l * TL))
    posf = pos.astype(jnp.float32)

    pb = pb_ref[...]                                       # [B, 4, TL]
    ab = ab_ref[...]                                       # [B, 4, TL]
    bw = bw_ref[...]                                       # [B, 1, TL] bbox_weight

    # ---- L1 (sum over positive anchors x 4 coords), lane-wise partial ----
    l1_lane = jnp.where(pos, jnp.sum(jnp.abs(pb - ab), axis=1, keepdims=True), 0.0)

    # ---- GIoU ----
    x1, y1, x2, y2 = pb[:, 0:1], pb[:, 1:2], pb[:, 2:3], pb[:, 3:4]
    x1g, y1g, x2g, y2g = ab[:, 0:1], ab[:, 1:2], ab[:, 2:3], ab[:, 3:4]
    xkis1 = jnp.maximum(x1, x1g)
    ykis1 = jnp.maximum(y1, y1g)
    xkis2 = jnp.minimum(x2, x2g)
    ykis2 = jnp.minimum(y2, y2g)
    w_inter = jnp.maximum(xkis2 - xkis1, 0.0)
    h_inter = jnp.maximum(ykis2 - ykis1, 0.0)
    overlap = w_inter * h_inter
    area1 = (x2 - x1) * (y2 - y1)
    area2 = (x2g - x1g) * (y2g - y1g)
    union = area1 + area2 - overlap + EPS
    iou = overlap * pl.reciprocal(union, approx=True)
    xc1 = jnp.minimum(x1, x1g)
    yc1 = jnp.minimum(y1, y1g)
    xc2 = jnp.maximum(x2, x2g)
    yc2 = jnp.maximum(y2, y2g)
    area_c = (xc2 - xc1) * (yc2 - yc1) + EPS
    miou = iou - (area_c - union) * pl.reciprocal(area_c, approx=True)
    giou = 1.0 - miou                                      # [B, 1, TL]
    iou_lane = jnp.where(pos, giou * bw, 0.0)

    # ---- Distribution Focal Loss ----
    ap = ap_ref[...]                                       # [2, TL]
    apx = ap[None, 0:1, :]                                 # [1, 1, TL]
    apy = ap[None, 1:2, :]
    hi = REG_MAX - 0.01
    targets = (jnp.clip(apx - x1g, 0.0, hi),               # l
               jnp.clip(apy - y1g, 0.0, hi),               # t
               jnp.clip(x2g - apx, 0.0, hi),               # r
               jnp.clip(y2g - apy, 0.0, hi))               # b

    pd = pd_ref[...]                                       # [B, 4*R1, TL]
    sub_idx = lax.broadcasted_iota(jnp.int32, (1, R1, TL), 1)   # hoisted (once)
    dfl_sum4 = jnp.zeros_like(bw)
    for c in range(4):                                     # unrolled, static slices
        logits = pd[:, c * R1:(c + 1) * R1, :]             # [B, 8, TL]
        t = targets[c]                                     # [B, 1, TL]
        tl_i = t.astype(jnp.int32)                         # floor (t >= 0)
        tr_i = tl_i + 1
        wl = tr_i.astype(jnp.float32) - t
        wr = 1.0 - wl
        m = jnp.max(logits, axis=1, keepdims=True)
        lse = jnp.log(jnp.sum(jnp.exp(logits - m), axis=1, keepdims=True)) + m
        # Fused gather: (lse-gl)*wl + (lse-gr)*wr == lse - sum(logits * gw)
        gw = (jnp.where(sub_idx == tl_i, wl, 0.0)
              + jnp.where(sub_idx == tr_i, wr, 0.0))       # [B, 8, TL]
        g = jnp.sum(logits * gw, axis=1, keepdims=True)    # [B, 1, TL]
        dfl_sum4 = dfl_sum4 + (lse - g)
    dfl_lane = jnp.where(pos, dfl_sum4 * 0.25 * bw, 0.0)   # mean over 4 coords

    # ---- per-tile partial sums over the batch axis (vector adds + 1 store) ----
    out_ref[...] = jnp.concatenate(
        [jnp.sum(l1_lane, axis=0),
         jnp.sum(iou_lane, axis=0),
         jnp.sum(dfl_lane, axis=0),
         jnp.sum(posf, axis=0)], axis=0)[None]             # [1, 4, TL]


def bbox_loss(pred_dist, pred_bboxes, anchor_points, assigned_labels,
              assigned_bboxes, assigned_scores, assigned_scores_sum,
              *, tile_l=8192):
    """Returns (loss_l1, loss_iou, loss_dfl) matching PPYOLOE BboxLoss.forward."""
    B, L, _ = pred_bboxes.shape

    # Coord-major layout plumbing: feature axis -> sublanes, anchors -> lanes.
    # TODO(synk): emit coord-major tensors upstream to avoid these XLA copies.
    pd = jnp.transpose(pred_dist, (0, 2, 1)).astype(jnp.float32)        # [B, 4*R1, L]
    pb = jnp.transpose(pred_bboxes, (0, 2, 1)).astype(jnp.float32)      # [B, 4, L]
    ab = jnp.transpose(assigned_bboxes, (0, 2, 1)).astype(jnp.float32)  # [B, 4, L]
    ap = jnp.transpose(anchor_points.astype(jnp.float32), (1, 0))       # [2, L]
    lab = assigned_labels.astype(jnp.int32).reshape(B, 1, L)            # [B, 1, L]
    # bbox_weight = assigned_scores.sum(-1): keeps the [B, C, L] scores out of
    # the kernel's DMA stream entirely (cheap reshape, no transpose needed).
    bw = assigned_scores.astype(jnp.float32).sum(-1).reshape(B, 1, L)   # [B, 1, L]

    # Tile choice: biggest lane-dense tile under a VMEM double-buffer budget
    # (sized conservatively for v7x's 64 MiB physical VMEM).  No HBM padding:
    # the ragged tail is masked inside the kernel.
    if L <= tile_l:
        TL = L                                  # single whole-L tile per step
    else:
        budget = 12 * 1024 * 1024               # bytes per buffer set (x2 double-buf)
        per_anchor = B * (4 * R1 + 4 + 4 + 8 + 8) * 4   # incl. sublane padding
        cap = budget // per_anchor
        TL = max(128, (min(tile_l, cap) // 128) * 128)
    GL = pl.cdiv(L, TL)

    kernel = functools.partial(_bbox_loss_kernel, L=L, TL=TL)
    partials = pl.pallas_call(
        kernel,
        out_shape=jax.ShapeDtypeStruct((GL, 4, TL), jnp.float32),
        grid=(GL,),
        in_specs=[
            pl.BlockSpec((B, 4 * R1, TL), lambda l: (0, 0, l)),   # pred_dist
            pl.BlockSpec((B, 4, TL), lambda l: (0, 0, l)),        # pred_bboxes
            pl.BlockSpec((2, TL), lambda l: (0, l)),              # anchor points
            pl.BlockSpec((B, 1, TL), lambda l: (0, 0, l)),        # labels
            pl.BlockSpec((B, 4, TL), lambda l: (0, 0, l)),        # assigned bboxes
            pl.BlockSpec((B, 1, TL), lambda l: (0, 0, l)),        # bbox_weight
        ],
        # Each grid step owns its own output block -> no shared accumulator,
        # so "parallel" is race-free and usable by v7x megacore.
        out_specs=pl.BlockSpec((1, 4, TL), lambda l: (l, 0, 0)),
        compiler_params=pltpu.CompilerParams(
            dimension_semantics=("parallel",),
            vmem_limit_bytes=48 * 1024 * 1024),
    )(pd, pb, ap, lab, ab, bw)

    # Tiny final reduction + normalization in the wrapper (matches the torch module).
    sums = jnp.sum(partials, axis=(0, 2))                  # [4]
    ss = jnp.asarray(assigned_scores_sum, jnp.float32).reshape(())
    num_pos = sums[3]
    has_pos = num_pos > 0.0
    zero = jnp.float32(0.0)
    loss_l1 = jnp.where(has_pos, sums[0] / jnp.maximum(num_pos * 4.0, 1.0), zero)
    loss_iou = jnp.where(has_pos, sums[1] / ss, zero)
    loss_dfl = jnp.where(has_pos, sums[2] / ss, zero)
    return loss_l1, loss_iou, loss_dfl


def bbox_loss_ref(pred_dist, pred_bboxes, anchor_points, assigned_labels,
                  assigned_bboxes, assigned_scores, assigned_scores_sum):
    """Pure-JAX reference mirroring the torch semantics (masked reductions)."""
    mask = (assigned_labels != NUM_CLASSES).astype(jnp.float32)        # [B,L]
    num_pos = mask.sum()
    mask3 = mask[..., None]

    l1 = jnp.sum(jnp.abs(pred_bboxes - assigned_bboxes) * mask3) / jnp.maximum(num_pos * 4.0, 1.0)

    pb, ab = pred_bboxes, assigned_bboxes
    x1, y1, x2, y2 = [pb[..., i:i + 1] for i in range(4)]
    x1g, y1g, x2g, y2g = [ab[..., i:i + 1] for i in range(4)]
    w_i = jnp.maximum(jnp.minimum(x2, x2g) - jnp.maximum(x1, x1g), 0.0)
    h_i = jnp.maximum(jnp.minimum(y2, y2g) - jnp.maximum(y1, y1g), 0.0)
    overlap = w_i * h_i
    union = (x2 - x1) * (y2 - y1) + (x2g - x1g) * (y2g - y1g) - overlap + EPS
    iou = overlap / union
    area_c = (jnp.maximum(x2, x2g) - jnp.minimum(x1, x1g)) * \
             (jnp.maximum(y2, y2g) - jnp.minimum(y1, y1g)) + EPS
    giou = 1.0 - (iou - (area_c - union) / area_c)                     # [B,L,1]

    bw = (assigned_scores.sum(-1) * mask)[..., None]                   # [B,L,1]
    loss_iou = jnp.sum(giou * bw) / assigned_scores_sum

    apb = jnp.broadcast_to(anchor_points[None], ab[..., :2].shape)
    ltrb = jnp.clip(jnp.concatenate([apb - ab[..., :2], ab[..., 2:] - apb], -1),
                    0.0, REG_MAX - 0.01)                               # [B,L,4]
    pdist = pred_dist.reshape(*pred_dist.shape[:-1], 4, R1)            # [B,L,4,R1]
    tl = ltrb.astype(jnp.int32)
    tr = tl + 1
    wl = tr.astype(jnp.float32) - ltrb
    wr = 1.0 - wl
    logp = jax.nn.log_softmax(pdist, axis=-1)
    ce_l = -jnp.take_along_axis(logp, tl[..., None], axis=-1)[..., 0]
    ce_r = -jnp.take_along_axis(logp, tr[..., None], axis=-1)[..., 0]
    dfl = jnp.mean(ce_l * wl + ce_r * wr, axis=-1, keepdims=True)      # [B,L,1]
    loss_dfl = jnp.sum(dfl * bw) / assigned_scores_sum

    has = num_pos > 0
    z = jnp.float32(0.0)
    return (jnp.where(has, l1, z), jnp.where(has, loss_iou, z), jnp.where(has, loss_dfl, z))


def _make_inputs(key, B, L):
    ks = jax.random.split(key, 8)
    pred_dist = jax.random.normal(ks[0], (B, L, 4 * R1), dtype=jnp.float32)

    xy1 = jax.random.uniform(ks[1], (B, L, 2), minval=0.0, maxval=8.0)
    wh = jax.random.uniform(ks[2], (B, L, 2), minval=1.0, maxval=8.0)
    pred_bboxes = jnp.concatenate([xy1, xy1 + wh], axis=-1)

    gxy1 = jax.random.uniform(ks[3], (B, L, 2), minval=0.0, maxval=8.0)
    gwh = jax.random.uniform(ks[4], (B, L, 2), minval=1.0, maxval=8.0)
    assigned_bboxes = jnp.concatenate([gxy1, gxy1 + gwh], axis=-1)

    anchor_points = jax.random.uniform(ks[5], (L, 2), minval=0.0, maxval=12.0)

    assigned_labels = jax.random.randint(ks[6], (B, L), 0, NUM_CLASSES + 1, dtype=jnp.int32)
    assigned_labels = assigned_labels.at[0, 0].set(0)  # guarantee >=1 positive

    assigned_scores = jax.random.uniform(ks[7], (B, L, NUM_CLASSES), minval=0.0, maxval=1.0)
    pos_mask = (assigned_labels != NUM_CLASSES).astype(jnp.float32)[..., None]
    assigned_scores = assigned_scores * pos_mask
    assigned_scores_sum = jnp.maximum(assigned_scores.sum(), 1.0)
    return (pred_dist, pred_bboxes, anchor_points, assigned_labels,
            assigned_bboxes, assigned_scores, assigned_scores_sum)


if __name__ == "__main__":
    base_key = jax.random.PRNGKey(0)
    k1, k2, k3 = jax.random.split(base_key, 3)

    # Case 1: tiny, single whole-L tile (no masking path).
    # Case 2: L not a multiple of the tile -> ragged tail mask inside kernel.
    # Case 3: multi-tile, tile divides L exactly.
    cases = [
        (k1, 2, 8, 8192),
        (k2, 2, 300, 128),
        (k3, 2, 512, 256),
    ]
    for key, B, L, tile_l in cases:
        args = _make_inputs(key, B, L)
        got = jax.block_until_ready(bbox_loss(*args, tile_l=tile_l))
        ref = bbox_loss_ref(*args)
        for name, g, r in zip(("l1", "iou", "dfl"), got, ref):
            assert jnp.allclose(g, r, rtol=3e-3, atol=1e-4), (name, B, L, g, r)

    print("KERNEL_OK")
</pallas_src>

<mosaic_0001>
module attributes {stable_mosaic.version = 11 : i64} {
  func.func @_bbox_loss_kernel(%arg0: i32, %arg1: memref<2x32x8xf32, #tpu.memory_space<vmem>>, %arg2: memref<2x4x8xf32, #tpu.memory_space<vmem>>, %arg3: memref<2x8xf32, #tpu.memory_space<vmem>>, %arg4: memref<2x1x8xi32, #tpu.memory_space<vmem>>, %arg5: memref<2x4x8xf32, #tpu.memory_space<vmem>>, %arg6: memref<2x1x8xf32, #tpu.memory_space<vmem>>, %arg7: memref<1x4x8xf32, #tpu.memory_space<vmem>>) attributes {dimension_semantics = [#tpu.dimension_semantics<parallel>], iteration_bounds = array<i64: 1>, scalar_prefetch = 0 : i64, scratch_operands = 0 : i64, tpu.core_type = #tpu.core_type<tc>, window_params = [{transform_indices = @transform_0, window_bounds = array<i64: 2, 32, 8>}, {transform_indices = @transform_1, window_bounds = array<i64: 2, 4, 8>}, {transform_indices = @transform_2, window_bounds = array<i64: 2, 8>}, {transform_indices = @transform_3, window_bounds = array<i64: 2, 1, 8>}, {transform_indices = @transform_4, window_bounds = array<i64: 2, 4, 8>}, {transform_indices = @transform_5, window_bounds = array<i64: 2, 1, 8>}, {transform_indices = @transform_6, window_bounds = array<i64: 1, 4, 8>}]} {
    %c0 = arith.constant 0 : index
    %c0_0 = arith.constant 0 : index
    %c0_1 = arith.constant 0 : index
    %0 = vector.load %arg4[%c0, %c0_0, %c0_1] : memref<2x1x8xi32, #tpu.memory_space<vmem>>, vector<2x1x8xi32>
    %c4_i32 = arith.constant 4 : i32
    %1 = vector.broadcast %c4_i32 : i32 to vector<2x1x8xi32>
    %2 = arith.cmpi ne, %0, %1 : vector<2x1x8xi32>
    %3 = arith.extui %2 : vector<2x1x8xi1> to vector<2x1x8xi32>
    %4 = arith.sitofp %3 : vector<2x1x8xi32> to vector<2x1x8xf32>
    %c0_2 = arith.constant 0 : index
    %c0_3 = arith.constant 0 : index
    %c0_4 = arith.constant 0 : index
    %5 = vector.load %arg2[%c0_2, %c0_3, %c0_4] : memref<2x4x8xf32, #tpu.memory_space<vmem>>, vector<2x4x8xf32>
    %c0_5 = arith.constant 0 : index
    %c0_6 = arith.constant 0 : index
    %c0_7 = arith.constant 0 : index
    %6 = vector.load %arg5[%c0_5, %c0_6, %c0_7] : memref<2x4x8xf32, #tpu.memory_space<vmem>>, vector<2x4x8xf32>
    %c0_8 = arith.constant 0 : index
    %c0_9 = arith.constant 0 : index
    %c0_10 = arith.constant 0 : index
    %7 = vector.load %arg6[%c0_8, %c0_9, %c0_10] : memref<2x1x8xf32, #tpu.memory_space<vmem>>, vector<2x1x8xf32>
    %8 = arith.subf %5, %6 : vector<2x4x8xf32>
    %9 = math.absf %8 : vector<2x4x8xf32>
    %cst = arith.constant dense<0.000000e+00> : vector<2x8xf32>
    %10 = vector.multi_reduction <add>, %9, %cst [1] : vector<2x4x8xf32> to vector<2x8xf32>
    %11 = vector.shape_cast %10 : vector<2x8xf32> to vector<2x1x8xf32>
    %cst_11 = arith.constant 0.000000e+00 : f32
    %12 = vector.broadcast %cst_11 : f32 to vector<2x1x8xf32>
    %13 = arith.select %2, %11, %12 : vector<2x1x8xi1>, vector<2x1x8xf32>
    %14 = vector.extract_strided_slice %5 {offsets = [0, 0, 0], sizes = [2, 1, 8], strides = [1, 1, 1]} : vector<2x4x8xf32> to vector<2x1x8xf32>
    %15 = vector.extract_strided_slice %5 {offsets = [0, 1, 0], sizes = [2, 1, 8], strides = [1, 1, 1]} : vector<2x4x8xf32> to vector<2x1x8xf32>
    %16 = vector.extract_strided_slice %5 {offsets = [0, 2, 0], sizes = [2, 1, 8], strides = [1, 1, 1]} : vector<2x4x8xf32> to vector<2x1x8xf32>
    %17 = vector.extract_strided_slice %5 {offsets = [0, 3, 0], sizes = [2, 1, 8], strides = [1, 1, 1]} : vector<2x4x8xf32> to vector<2x1x8xf32>
    %18 = vector.extract_strided_slice %6 {offsets = [0, 0, 0], sizes = [2, 1, 8], strides = [1, 1, 1]} : vector<2x4x8xf32> to vector<2x1x8xf32>
    %19 = vector.extract_strided_slice %6 {offsets = [0, 1, 0], sizes = [2, 1, 8], strides = [1, 1, 1]} : vector<2x4x8xf32> to vector<2x1x8xf32>
    %20 = vector.extract_strided_slice %6 {offsets = [0, 2, 0], sizes = [2, 1, 8], strides = [1, 1, 1]} : vector<2x4x8xf32> to vector<2x1x8xf32>
    %21 = vector.extract_strided_slice %6 {offsets = [0, 3, 0], sizes = [2, 1, 8], strides = [1, 1, 1]} : vector<2x4x8xf32> to vector<2x1x8xf32>
    %22 = arith.maximumf %14, %18 : vector<2x1x8xf32>
    %23 = arith.maximumf %15, %19 : vector<2x1x8xf32>
    %24 = arith.minimumf %16, %20 : vector<2x1x8xf32>
    %25 = arith.minimumf %17, %21 : vector<2x1x8xf32>
    %26 = arith.subf %24, %22 : vector<2x1x8xf32>
    %cst_12 = arith.constant 0.000000e+00 : f32
    %27 = vector.broadcast %cst_12 : f32 to vector<2x1x8xf32>
    %28 = arith.maximumf %26, %27 : vector<2x1x8xf32>
    %29 = arith.subf %25, %23 : vector<2x1x8xf32>
    %cst_13 = arith.constant 0.000000e+00 : f32
    %30 = vector.broadcast %cst_13 : f32 to vector<2x1x8xf32>
    %31 = arith.maximumf %29, %30 : vector<2x1x8xf32>
    %32 = arith.mulf %28, %31 : vector<2x1x8xf32>
    %33 = arith.subf %16, %14 : vector<2x1x8xf32>
    %34 = arith.subf %17, %15 : vector<2x1x8xf32>
    %35 = arith.mulf %33, %34 : vector<2x1x8xf32>
    %36 = arith.subf %20, %18 : vector<2x1x8xf32>
    %37 = arith.subf %21, %19 : vector<2x1x8xf32>
    %38 = arith.mulf %36, %37 : vector<2x1x8xf32>
    %39 = arith.addf %35, %38 : vector<2x1x8xf32>
    %40 = arith.subf %39, %32 : vector<2x1x8xf32>
    %cst_14 = arith.constant 1.000000e-10 : f32
    %41 = vector.broadcast %cst_14 : f32 to vector<2x1x8xf32>
    %42 = arith.addf %40, %41 : vector<2x1x8xf32>
    %43 = tpu.reciprocal %42 {approx = true} : vector<2x1x8xf32> -> vector<2x1x8xf32>
    %44 = arith.mulf %32, %43 : vector<2x1x8xf32>
    %45 = arith.minimumf %14, %18 : vector<2x1x8xf32>
    %46 = arith.minimumf %15, %19 : vector<2x1x8xf32>
    %47 = arith.maximumf %16, %20 : vector<2x1x8xf32>
    %48 = arith.maximumf %17, %21 : vector<2x1x8xf32>
    %49 = arith.subf %47, %45 : vector<2x1x8xf32>
    %50 = arith.subf %48, %46 : vector<2x1x8xf32>
    %51 = arith.mulf %49, %50 : vector<2x1x8xf32>
    %cst_15 = arith.constant 1.000000e-10 : f32
    %52 = vector.broadcast %cst_15 : f32 to vector<2x1x8xf32>
    %53 = arith.addf %51, %52 : vector<2x1x8xf32>
    %54 = arith.subf %53, %42 : vector<2x1x8xf32>
    %55 = tpu.reciprocal %53 {approx = true} : vector<2x1x8xf32> -> vector<2x1x8xf32>
    %56 = arith.mulf %54, %55 : vector<2x1x8xf32>
    %57 = arith.subf %44, %56 : vector<2x1x8xf32>
    %cst_16 = arith.constant 1.000000e+00 : f32
    %58 = vector.broadcast %cst_16 : f32 to vector<2x1x8xf32>
    %59 = arith.subf %58, %57 : vector<2x1x8xf32>
    %60 = arith.mulf %59, %7 : vector<2x1x8xf32>
    %cst_17 = arith.constant 0.000000e+00 : f32
    %61 = vector.broadcast %cst_17 : f32 to vector<2x1x8xf32>
    %62 = arith.select %2, %60, %61 : vector<2x1x8xi1>, vector<2x1x8xf32>
    %c0_18 = arith.constant 0 : index
    %c0_19 = arith.constant 0 : index
    %63 = vector.load %arg3[%c0_18, %c0_19] : memref<2x8xf32, #tpu.memory_space<vmem>>, vector<2x8xf32>
    %64 = vector.extract_strided_slice %63 {offsets = [0, 0], sizes = [1, 8], strides = [1, 1]} : vector<2x8xf32> to vector<1x8xf32>
    %65 = vector.shape_cast %64 : vector<1x8xf32> to vector<1x1x8xf32>
    %66 = vector.extract_strided_slice %63 {offsets = [1, 0], sizes = [1, 8], strides = [1, 1]} : vector<2x8xf32> to vector<1x8xf32>
    %67 = vector.shape_cast %66 : vector<1x8xf32> to vector<1x1x8xf32>
    %68 = vector.broadcast %65 : vector<1x1x8xf32> to vector<2x1x8xf32>
    %69 = arith.subf %68, %18 : vector<2x1x8xf32>
    %cst_20 = arith.constant 0.000000e+00 : f32
    %cst_21 = arith.constant 6.990000e+00 : f32
    %70 = vector.broadcast %cst_20 : f32 to vector<2x1x8xf32>
    %71 = arith.maximumf %70, %69 : vector<2x1x8xf32>
    %72 = vector.broadcast %cst_21 : f32 to vector<2x1x8xf32>
    %73 = arith.minimumf %72, %71 : vector<2x1x8xf32>
    %74 = vector.broadcast %67 : vector<1x1x8xf32> to vector<2x1x8xf32>
    %75 = arith.subf %74, %19 : vector<2x1x8xf32>
    %cst_22 = arith.constant 0.000000e+00 : f32
    %cst_23 = arith.constant 6.990000e+00 : f32
    %76 = vector.broadcast %cst_22 : f32 to vector<2x1x8xf32>
    %77 = arith.maximumf %76, %75 : vector<2x1x8xf32>
    %78 = vector.broadcast %cst_23 : f32 to vector<2x1x8xf32>
    %79 = arith.minimumf %78, %77 : vector<2x1x8xf32>
    %80 = vector.broadcast %65 : vector<1x1x8xf32> to vector<2x1x8xf32>
    %81 = arith.subf %20, %80 : vector<2x1x8xf32>
    %cst_24 = arith.constant 0.000000e+00 : f32
    %cst_25 = arith.constant 6.990000e+00 : f32
    %82 = vector.broadcast %cst_24 : f32 to vector<2x1x8xf32>
    %83 = arith.maximumf %82, %81 : vector<2x1x8xf32>
    %84 = vector.broadcast %cst_25 : f32 to vector<2x1x8xf32>
    %85 = arith.minimumf %84, %83 : vector<2x1x8xf32>
    %86 = vector.broadcast %67 : vector<1x1x8xf32> to vector<2x1x8xf32>
    %87 = arith.subf %21, %86 : vector<2x1x8xf32>
    %cst_26 = arith.constant 0.000000e+00 : f32
    %cst_27 = arith.constant 6.990000e+00 : f32
    %88 = vector.broadcast %cst_26 : f32 to vector<2x1x8xf32>
    %89 = arith.maximumf %88, %87 : vector<2x1x8xf32>
    %90 = vector.broadcast %cst_27 : f32 to vector<2x1x8xf32>
    %91 = arith.minimumf %90, %89 : vector<2x1x8xf32>
    %c0_28 = arith.constant 0 : index
    %c0_29 = arith.constant 0 : index
    %c0_30 = arith.constant 0 : index
    %92 = vector.load %arg1[%c0_28, %c0_29, %c0_30] : memref<2x32x8xf32, #tpu.memory_space<vmem>>, vector<2x32x8xf32>
    %93 = tpu.iota {dimensions = array<i32: 1>} : vector<1x8x8xi32>
    %cst_31 = arith.constant 0.000000e+00 : f32
    %94 = vector.broadcast %cst_31 : f32 to vector<2x1x8xf32>
    %95 = vector.extract_strided_slice %92 {offsets = [0, 0, 0], sizes = [2, 8, 8], strides = [1, 1, 1]} : vector<2x32x8xf32> to vector<2x8x8xf32>
    %96 = arith.fptosi %73 : vector<2x1x8xf32> to vector<2x1x8xi32>
    %c1_i32 = arith.constant 1 : i32
    %97 = vector.broadcast %c1_i32 : i32 to vector<2x1x8xi32>
    %98 = arith.addi %96, %97 : vector<2x1x8xi32>
    %99 = arith.sitofp %98 : vector<2x1x8xi32> to vector<2x1x8xf32>
    %100 = arith.subf %99, %73 : vector<2x1x8xf32>
    %cst_32 = arith.constant 1.000000e+00 : f32
    %101 = vector.broadcast %cst_32 : f32 to vector<2x1x8xf32>
    %102 = arith.subf %101, %100 : vector<2x1x8xf32>
    %cst_33 = arith.constant dense<0xFF800000> : vector<2x8xf32>
    %103 = vector.multi_reduction <maximumf>, %95, %cst_33 [1] : vector<2x8x8xf32> to vector<2x8xf32>
    %104 = vector.shape_cast %103 : vector<2x8xf32> to vector<2x1x8xf32>
    %105 = vector.broadcast %104 : vector<2x1x8xf32> to vector<2x8x8xf32>
    %106 = arith.subf %95, %105 : vector<2x8x8xf32>
    %107 = math.exp %106 : vector<2x8x8xf32>
    %cst_34 = arith.constant dense<0.000000e+00> : vector<2x8xf32>
    %108 = vector.multi_reduction <add>, %107, %cst_34 [1] : vector<2x8x8xf32> to vector<2x8xf32>
    %109 = vector.shape_cast %108 : vector<2x8xf32> to vector<2x1x8xf32>
    %110 = math.log %109 : vector<2x1x8xf32>
    %111 = arith.addf %110, %104 : vector<2x1x8xf32>
    %112 = vector.broadcast %93 : vector<1x8x8xi32> to vector<2x8x8xi32>
    %113 = vector.broadcast %96 : vector<2x1x8xi32> to vector<2x8x8xi32>
    %114 = arith.cmpi eq, %112, %113 : vector<2x8x8xi32>
    %cst_35 = arith.constant 0.000000e+00 : f32
    %115 = vector.shape_cast %100 : vector<2x1x8xf32> to vector<2x1x8xf32>
    %116 = vector.broadcast %115 : vector<2x1x8xf32> to vector<2x8x8xf32>
    %117 = vector.broadcast %cst_35 : f32 to vector<2x8x8xf32>
    %118 = arith.select %114, %116, %117 : vector<2x8x8xi1>, vector<2x8x8xf32>
    %119 = vector.broadcast %93 : vector<1x8x8xi32> to vector<2x8x8xi32>
    %120 = vector.broadcast %98 : vector<2x1x8xi32> to vector<2x8x8xi32>
    %121 = arith.cmpi eq, %119, %120 : vector<2x8x8xi32>
    %cst_36 = arith.constant 0.000000e+00 : f32
    %122 = vector.shape_cast %102 : vector<2x1x8xf32> to vector<2x1x8xf32>
    %123 = vector.broadcast %122 : vector<2x1x8xf32> to vector<2x8x8xf32>
    %124 = vector.broadcast %cst_36 : f32 to vector<2x8x8xf32>
    %125 = arith.select %121, %123, %124 : vector<2x8x8xi1>, vector<2x8x8xf32>
    %126 = arith.addf %118, %125 : vector<2x8x8xf32>
    %127 = arith.mulf %95, %126 : vector<2x8x8xf32>
    %cst_37 = arith.constant dense<0.000000e+00> : vector<2x8xf32>
    %128 = vector.multi_reduction <add>, %127, %cst_37 [1] : vector<2x8x8xf32> to vector<2x8xf32>
    %129 = vector.shape_cast %128 : vector<2x8xf32> to vector<2x1x8xf32>
    %130 = arith.subf %111, %129 : vector<2x1x8xf32>
    %131 = arith.addf %94, %130 : vector<2x1x8xf32>
    %132 = vector.extract_strided_slice %92 {offsets = [0, 8, 0], sizes = [2, 8, 8], strides = [1, 1, 1]} : vector<2x32x8xf32> to vector<2x8x8xf32>
    %133 = arith.fptosi %79 : vector<2x1x8xf32> to vector<2x1x8xi32>
    %c1_i32_38 = arith.constant 1 : i32
    %134 = vector.broadcast %c1_i32_38 : i32 to vector<2x1x8xi32>
    %135 = arith.addi %133, %134 : vector<2x1x8xi32>
    %136 = arith.sitofp %135 : vector<2x1x8xi32> to vector<2x1x8xf32>
    %137 = arith.subf %136, %79 : vector<2x1x8xf32>
    %cst_39 = arith.constant 1.000000e+00 : f32
    %138 = vector.broadcast %cst_39 : f32 to vector<2x1x8xf32>
    %139 = arith.subf %138, %137 : vector<2x1x8xf32>
    %cst_40 = arith.constant dense<0xFF800000> : vector<2x8xf32>
    %140 = vector.multi_reduction <maximumf>, %132, %cst_40 [1] : vector<2x8x8xf32> to vector<2x8xf32>
    %141 = vector.shape_cast %140 : vector<2x8xf32> to vector<2x1x8xf32>
    %142 = vector.broadcast %141 : vector<2x1x8xf32> to vector<2x8x8xf32>
    %143 = arith.subf %132, %142 : vector<2x8x8xf32>
    %144 = math.exp %143 : vector<2x8x8xf32>
    %cst_41 = arith.constant dense<0.000000e+00> : vector<2x8xf32>
    %145 = vector.multi_reduction <add>, %144, %cst_41 [1] : vector<2x8x8xf32> to vector<2x8xf32>
    %146 = vector.shape_cast %145 : vector<2x8xf32> to vector<2x1x8xf32>
    %147 = math.log %146 : vector<2x1x8xf32>
    %148 = arith.addf %147, %141 : vector<2x1x8xf32>
    %149 = vector.broadcast %93 : vector<1x8x8xi32> to vector<2x8x8xi32>
    %150 = vector.broadcast %133 : vector<2x1x8xi32> to vector<2x8x8xi32>
    %151 = arith.cmpi eq, %149, %150 : vector<2x8x8xi32>
    %cst_42 = arith.constant 0.000000e+00 : f32
    %152 = vector.shape_cast %137 : vector<2x1x8xf32> to vector<2x1x8xf32>
    %153 = vector.broadcast %152 : vector<2x1x8xf32> to vector<2x8x8xf32>
    %154 = vector.broadcast %cst_42 : f32 to vector<2x8x8xf32>
    %155 = arith.select %151, %153, %154 : vector<2x8x8xi1>, vector<2x8x8xf32>
    %156 = vector.broadcast %93 : vector<1x8x8xi32> to vector<2x8x8xi32>
    %157 = vector.broadcast %135 : vector<2x1x8xi32> to vector<2x8x8xi32>
    %158 = arith.cmpi eq, %156, %157 : vector<2x8x8xi32>
    %cst_43 = arith.constant 0.000000e+00 : f32
    %159 = vector.shape_cast %139 : vector<2x1x8xf32> to vector<2x1x8xf32>
    %160 = vector.broadcast %159 : vector<2x1x8xf32> to vector<2x8x8xf32>
    %161 = vector.broadcast %cst_43 : f32 to vector<2x8x8xf32>
    %162 = arith.select %158, %160, %161 : vector<2x8x8xi1>, vector<2x8x8xf32>
    %163 = arith.addf %155, %162 : vector<2x8x8xf32>
    %164 = arith.mulf %132, %163 : vector<2x8x8xf32>
    %cst_44 = arith.constant dense<0.000000e+00> : vector<2x8xf32>
    %165 = vector.multi_reduction <add>, %164, %cst_44 [1] : vector<2x8x8xf32> to vector<2x8xf32>
    %166 = vector.shape_cast %165 : vector<2x8xf32> to vector<2x1x8xf32>
    %167 = arith.subf %148, %166 : vector<2x1x8xf32>
    %168 = arith.addf %131, %167 : vector<2x1x8xf32>
    %169 = vector.extract_strided_slice %92 {offsets = [0, 16, 0], sizes = [2, 8, 8], strides = [1, 1, 1]} : vector<2x32x8xf32> to vector<2x8x8xf32>
    %170 = arith.fptosi %85 : vector<2x1x8xf32> to vector<2x1x8xi32>
    %c1_i32_45 = arith.constant 1 : i32
    %171 = vector.broadcast %c1_i32_45 : i32 to vector<2x1x8xi32>
    %172 = arith.addi %170, %171 : vector<2x1x8xi32>
    %173 = arith.sitofp %172 : vector<2x1x8xi32> to vector<2x1x8xf32>
    %174 = arith.subf %173, %85 : vector<2x1x8xf32>
    %cst_46 = arith.constant 1.000000e+00 : f32
    %175 = vector.broadcast %cst_46 : f32 to vector<2x1x8xf32>
    %176 = arith.subf %175, %174 : vector<2x1x8xf32>
    %cst_47 = arith.constant dense<0xFF800000> : vector<2x8xf32>
    %177 = vector.multi_reduction <maximumf>, %169, %cst_47 [1] : vector<2x8x8xf32> to vector<2x8xf32>
    %178 = vector.shape_cast %177 : vector<2x8xf32> to vector<2x1x8xf32>
    %179 = vector.broadcast %178 : vector<2x1x8xf32> to vector<2x8x8xf32>
    %180 = arith.subf %169, %179 : vector<2x8x8xf32>
    %181 = math.exp %180 : vector<2x8x8xf32>
    %cst_48 = arith.constant dense<0.000000e+00> : vector<2x8xf32>
    %182 = vector.multi_reduction <add>, %181, %cst_48 [1] : vector<2x8x8xf32> to vector<2x8xf32>
    %183 = vector.shape_cast %182 : vector<2x8xf32> to vector<2x1x8xf32>
    %184 = math.log %183 : vector<2x1x8xf32>
    %185 = arith.addf %184, %178 : vector<2x1x8xf32>
    %186 = vector.broadcast %93 : vector<1x8x8xi32> to vector<2x8x8xi32>
    %187 = vector.broadcast %170 : vector<2x1x8xi32> to vector<2x8x8xi32>
    %188 = arith.cmpi eq, %186, %187 : vector<2x8x8xi32>
    %cst_49 = arith.constant 0.000000e+00 : f32
    %189 = vector.shape_cast %174 : vector<2x1x8xf32> to vector<2x1x8xf32>
    %190 = vector.broadcast %189 : vector<2x1x8xf32> to vector<2x8x8xf32>
    %191 = vector.broadcast %cst_49 : f32 to vector<2x8x8xf32>
    %192 = arith.select %188, %190, %191 : vector<2x8x8xi1>, vector<2x8x8xf32>
    %193 = vector.broadcast %93 : vector<1x8x8xi32> to vector<2x8x8xi32>
    %194 = vector.broadcast %172 : vector<2x1x8xi32> to vector<2x8x8xi32>
    %195 = arith.cmpi eq, %193, %194 : vector<2x8x8xi32>
    %cst_50 = arith.constant 0.000000e+00 : f32
    %196 = vector.shape_cast %176 : vector<2x1x8xf32> to vector<2x1x8xf32>
    %197 = vector.broadcast %196 : vector<2x1x8xf32> to vector<2x8x8xf32>
    %198 = vector.broadcast %cst_50 : f32 to vector<2x8x8xf32>
    %199 = arith.select %195, %197, %198 : vector<2x8x8xi1>, vector<2x8x8xf32>
    %200 = arith.addf %192, %199 : vector<2x8x8xf32>
    %201 = arith.mulf %169, %200 : vector<2x8x8xf32>
    %cst_51 = arith.constant dense<0.000000e+00> : vector<2x8xf32>
    %202 = vector.multi_reduction <add>, %201, %cst_51 [1] : vector<2x8x8xf32> to vector<2x8xf32>
    %203 = vector.shape_cast %202 : vector<2x8xf32> to vector<2x1x8xf32>
    %204 = arith.subf %185, %203 : vector<2x1x8xf32>
    %205 = arith.addf %168, %204 : vector<2x1x8xf32>
    %206 = vector.extract_strided_slice %92 {offsets = [0, 24, 0], sizes = [2, 8, 8], strides = [1, 1, 1]} : vector<2x32x8xf32> to vector<2x8x8xf32>
    %207 = arith.fptosi %91 : vector<2x1x8xf32> to vector<2x1x8xi32>
    %c1_i32_52 = arith.constant 1 : i32
    %208 = vector.broadcast %c1_i32_52 : i32 to vector<2x1x8xi32>
    %209 = arith.addi %207, %208 : vector<2x1x8xi32>
    %210 = arith.sitofp %209 : vector<2x1x8xi32> to vector<2x1x8xf32>
    %211 = arith.subf %210, %91 : vector<2x1x8xf32>
    %cst_53 = arith.constant 1.000000e+00 : f32
    %212 = vector.broadcast %cst_53 : f32 to vector<2x1x8xf32>
    %213 = arith.subf %212, %211 : vector<2x1x8xf32>
    %cst_54 = arith.constant dense<0xFF800000> : vector<2x8xf32>
    %214 = vector.multi_reduction <maximumf>, %206, %cst_54 [1] : vector<2x8x8xf32> to vector<2x8xf32>
    %215 = vector.shape_cast %214 : vector<2x8xf32> to vector<2x1x8xf32>
    %216 = vector.broadcast %215 : vector<2x1x8xf32> to vector<2x8x8xf32>
    %217 = arith.subf %206, %216 : vector<2x8x8xf32>
    %218 = math.exp %217 : vector<2x8x8xf32>
    %cst_55 = arith.constant dense<0.000000e+00> : vector<2x8xf32>
    %219 = vector.multi_reduction <add>, %218, %cst_55 [1] : vector<2x8x8xf32> to vector<2x8xf32>
    %220 = vector.shape_cast %219 : vector<2x8xf32> to vector<2x1x8xf32>
    %221 = math.log %220 : vector<2x1x8xf32>
    %222 = arith.addf %221, %215 : vector<2x1x8xf32>
    %223 = vector.broadcast %93 : vector<1x8x8xi32> to vector<2x8x8xi32>
    %224 = vector.broadcast %207 : vector<2x1x8xi32> to vector<2x8x8xi32>
    %225 = arith.cmpi eq, %223, %224 : vector<2x8x8xi32>
    %cst_56 = arith.constant 0.000000e+00 : f32
    %226 = vector.shape_cast %211 : vector<2x1x8xf32> to vector<2x1x8xf32>
    %227 = vector.broadcast %226 : vector<2x1x8xf32> to vector<2x8x8xf32>
    %228 = vector.broadcast %cst_56 : f32 to vector<2x8x8xf32>
    %229 = arith.select %225, %227, %228 : vector<2x8x8xi1>, vector<2x8x8xf32>
    %230 = vector.broadcast %93 : vector<1x8x8xi32> to vector<2x8x8xi32>
    %231 = vector.broadcast %209 : vector<2x1x8xi32> to vector<2x8x8xi32>
    %232 = arith.cmpi eq, %230, %231 : vector<2x8x8xi32>
    %cst_57 = arith.constant 0.000000e+00 : f32
    %233 = vector.shape_cast %213 : vector<2x1x8xf32> to vector<2x1x8xf32>
    %234 = vector.broadcast %233 : vector<2x1x8xf32> to vector<2x8x8xf32>
    %235 = vector.broadcast %cst_57 : f32 to vector<2x8x8xf32>
    %236 = arith.select %232, %234, %235 : vector<2x8x8xi1>, vector<2x8x8xf32>
    %237 = arith.addf %229, %236 : vector<2x8x8xf32>
    %238 = arith.mulf %206, %237 : vector<2x8x8xf32>
    %cst_58 = arith.constant dense<0.000000e+00> : vector<2x8xf32>
    %239 = vector.multi_reduction <add>, %238, %cst_58 [1] : vector<2x8x8xf32> to vector<2x8xf32>
    %240 = vector.shape_cast %239 : vector<2x8xf32> to vector<2x1x8xf32>
    %241 = arith.subf %222, %240 : vector<2x1x8xf32>
    %242 = arith.addf %205, %241 : vector<2x1x8xf32>
    %cst_59 = arith.constant 2.500000e-01 : f32
    %243 = vector.broadcast %cst_59 : f32 to vector<2x1x8xf32>
    %244 = arith.mulf %242, %243 : vector<2x1x8xf32>
    %245 = arith.mulf %244, %7 : vector<2x1x8xf32>
    %cst_60 = arith.constant 0.000000e+00 : f32
    %246 = vector.broadcast %cst_60 : f32 to vector<2x1x8xf32>
    %247 = arith.select %2, %245, %246 : vector<2x1x8xi1>, vector<2x1x8xf32>
    %cst_61 = arith.constant dense<0.000000e+00> : vector<1x8xf32>
    %248 = vector.multi_reduction <add>, %13, %cst_61 [0] : vector<2x1x8xf32> to vector<1x8xf32>
    %cst_62 = arith.constant dense<0.000000e+00> : vector<1x8xf32>
    %249 = vector.multi_reduction <add>, %62, %cst_62 [0] : vector<2x1x8xf32> to vector<1x8xf32>
    %cst_63 = arith.constant dense<0.000000e+00> : vector<1x8xf32>
    %250 = vector.multi_reduction <add>, %247, %cst_63 [0] : vector<2x1x8xf32> to vector<1x8xf32>
    %cst_64 = arith.constant dense<0.000000e+00> : vector<1x8xf32>
    %251 = vector.multi_reduction <add>, %4, %cst_64 [0] : vector<2x1x8xf32> to vector<1x8xf32>
    %252 = tpu.concatenate %248, %249, %250, %251 in 0 : vector<1x8xf32>, vector<1x8xf32>, vector<1x8xf32>, vector<1x8xf32> -> vector<4x8xf32>
    %253 = vector.shape_cast %252 : vector<4x8xf32> to vector<1x4x8xf32>
    %c0_65 = arith.constant 0 : index
    %c0_66 = arith.constant 0 : index
    %c0_67 = arith.constant 0 : index
    %254 = vector.load %arg7[%c0_65, %c0_66, %c0_67] : memref<1x4x8xf32, #tpu.memory_space<vmem>>, vector<1x4x8xf32>
    tpu.vector_store %arg7[%c0_65, %c0_66, %c0_67], %253 {strides = array<i32>} : memref<1x4x8xf32, #tpu.memory_space<vmem>>, vector<1x4x8xf32>,
    return
  }
  func.func @transform_0(%arg0: i32) -> (i32, i32, i32) {
    %c0_i32 = arith.constant 0 : i32
    %c0_i32_0 = arith.constant 0 : i32
    %c0_i32_1 = arith.constant 0 : i32
    return %c0_i32, %c0_i32_0, %arg0 : i32, i32, i32
  }
  func.func @transform_1(%arg0: i32) -> (i32, i32, i32) {
    %c0_i32 = arith.constant 0 : i32
    %c0_i32_0 = arith.constant 0 : i32
    %c0_i32_1 = arith.constant 0 : i32
    return %c0_i32, %c0_i32_0, %arg0 : i32, i32, i32
  }
  func.func @transform_2(%arg0: i32) -> (i32, i32) {
    %c0_i32 = arith.constant 0 : i32
    %c0_i32_0 = arith.constant 0 : i32
    return %c0_i32, %arg0 : i32, i32
  }
  func.func @transform_3(%arg0: i32) -> (i32, i32, i32) {
    %c0_i32 = arith.constant 0 : i32
    %c0_i32_0 = arith.constant 0 : i32
    %c0_i32_1 = arith.constant 0 : i32
    return %c0_i32, %c0_i32_0, %arg0 : i32, i32, i32
  }
  func.func @transform_4(%arg0: i32) -> (i32, i32, i32) {
    %c0_i32 = arith.constant 0 : i32
    %c0_i32_0 = arith.constant 0 : i32
    %c0_i32_1 = arith.constant 0 : i32
    return %c0_i32, %c0_i32_0, %arg0 : i32, i32, i32
  }
  func.func @transform_5(%arg0: i32) -> (i32, i32, i32) {
    %c0_i32 = arith.constant 0 : i32
    %c0_i32_0 = arith.constant 0 : i32
    %c0_i32_1 = arith.constant 0 : i32
    return %c0_i32, %c0_i32_0, %arg0 : i32, i32, i32
  }
  func.func @transform_6(%arg0: i32) -> (i32, i32, i32) {
    %c0_i32 = arith.constant 0 : i32
    %c0_i32_0 = arith.constant 0 : i32
    %c0_i32_1 = arith.constant 0 : i32
    return %arg0, %c0_i32, %c0_i32_0 : i32, i32, i32
  }
}

</mosaic_0001>

<llo_original>
// kernel: tpu_custom_call.1
$region0: #{tpu_custom_call.1}
  #allocation0 [shape = 'u32[]', space=smem, size = 0x4, offset = 0x4, fixed_abs, tag = 'smem constant byte address 0x4 - core index']
  #allocation1 [shape = 'u32[72,128]{1,0:T(1,128)}', space=vmem, size = 0x9000, scoped, tag = 'internal scratch']
  %s0 = inlined_call_operand.vmem [shape: f32[2,32,8], index: 0, kind: input, shape index: {}]
  %s1 = inlined_call_operand.vmem [shape: f32[2,4,8], index: 1, kind: input, shape index: {}]
  %s2 = inlined_call_operand.vmem [shape: f32[2,8], index: 2, kind: input, shape index: {}]
  %s3 = inlined_call_operand.vmem [shape: s32[2,1,8], index: 3, kind: input, shape index: {}]
  %s4 = inlined_call_operand.vmem [shape: f32[2,4,8], index: 4, kind: input, shape index: {}]
  %s5 = inlined_call_operand.vmem [shape: f32[2,1,8], index: 5, kind: input, shape index: {}]
  %s6 = inlined_call_operand.hbm [shape: f32[1,4,8], index: 6, kind: output, shape index: {}]
  %s7 = sld [smem:[#allocation0]]
  $region34: #{tpu_custom_call.1} parent=0
    _
  %s9 = ssub.s32 1, %s7
  %s10 = scalar_select 0, %s9, %s7
  $region1: #{tpu_custom_call.1} parent=0
    #allocation2 [shape = 'u8[2048]{0}', space=vmem, size = 0x800, scoped, tag = 'output window, operand 0, single buffered']
    #allocation3 [shape = 's32[1]{0}', space=sflag, size = 0x4, scoped, tag = 'scoped memory for tpu_custom_call.1']
    %11 = vsyncpa [#allocation3], 0
    // Predicated region
    $region2: #{tpu_custom_call.1} parent=1 // pred_check
      _
    $region3: #{tpu_custom_call.1} parent=1 // pred_check_branch
      %13 = sbr.rel (0) target = $region5
    $region4: #{tpu_custom_call.1} parent=1 // pred_region
      _
    $region5: #{tpu_custom_call.1} parent=1 // pred_fallthru
      _
    // Predicated region
    $region6: #{tpu_custom_call.1} parent=1 // pred_check
      _
    $region7: #{tpu_custom_call.1} parent=1 // pred_check_branch
      %15 = sbr.rel (0) target = $region9
    $region8: #{tpu_custom_call.1} parent=1 // pred_region
      _
    $region9: #{tpu_custom_call.1} parent=1 // pred_fallthru
      _
    // Predicated region
    $region10: #{tpu_custom_call.1} parent=1 // pred_check
      _
    $region11: #{tpu_custom_call.1} parent=1 // pred_check_branch
      %17 = sbr.rel (0) target = $region13
    $region12: #{tpu_custom_call.1} parent=1 // pred_region
      _
    $region13: #{tpu_custom_call.1} parent=1 // pred_fallthru
      _
    // Predicated region
    $region14: #{tpu_custom_call.1} parent=1 // pred_check
      _
    $region15: #{tpu_custom_call.1} parent=1 // pred_check_branch
      %19 = sbr.rel (0) target = $region17
    $region16: #{tpu_custom_call.1} parent=1 // pred_region
      _
    $region17: #{tpu_custom_call.1} parent=1 // pred_fallthru
      _
    // Predicated region
    $region18: #{tpu_custom_call.1} parent=1 // pred_check
      _
    $region19: #{tpu_custom_call.1} parent=1 // pred_check_branch
      %21 = sbr.rel (0) target = $region21
    $region20: #{tpu_custom_call.1} parent=1 // pred_region
      _
    $region21: #{tpu_custom_call.1} parent=1 // pred_fallthru
      _
    // Predicated region
    $region22: #{tpu_custom_call.1} parent=1 // pred_check
      _
    $region23: #{tpu_custom_call.1} parent=1 // pred_check_branch
      %23 = sbr.rel (0) target = $region25
    $region24: #{tpu_custom_call.1} parent=1 // pred_region
      _
    $region25: #{tpu_custom_call.1} parent=1 // pred_fallthru
      _
    %v24 = vld [vmem:[%s3] sm:$0x1]
    %v25 = vld [vmem:[%s3 + $0x1] sm:$0x1]
    %vm26 = vcmp.ne.s32.totalorder %v24, 4
    %vm27 = vcmp.ne.s32.totalorder %v25, 4
    %v28 = vsel %vm26, 1, 0
    %v29 = vsel %vm27, 1, 0
    %v30 = vcvt.s32.f32 %v28
    %v31 = vcvt.s32.f32 %v29
    %v32 = vld [vmem:[%s1] sm:$0xf]
    %v33 = vld [vmem:[%s1 + $0x4] sm:$0xf]
    %v34 = vld [vmem:[%s4] sm:$0xf]
    %v35 = vld [vmem:[%s4 + $0x4] sm:$0xf]
    %v36 = vld [vmem:[%s5] sm:$0x1]
    %v37 = vld [vmem:[%s5 + $0x1] sm:$0x1]
    %v38 = vsub.f32 %v32, %v34
    %v39 = vsub.f32 %v33, %v35
    %v40 = vand.u32 2147483647, %v38
    %v41 = vand.u32 2147483647, %v39
    %vm42 = vcmask 60416
    %v43 = vsel %vm42, %v40, 0.0
    %v44 = vrot.slane %v43, 4
    %v45 = vadd.f32 %v43, %v44
    %v46 = vrot.slane %v45, 2
    %v47 = vadd.f32 %v45, %v46
    %v48 = vrot.slane %v47, 1
    %v49 = vadd.f32 %v47, %v48
    %v50 = vsel %vm42, %v41, 0.0
    %v51 = vrot.slane %v50, 4
    %v52 = vadd.f32 %v50, %v51
    %v53 = vrot.slane %v52, 2
    %v54 = vadd.f32 %v52, %v53
    %v55 = vrot.slane %v54, 1
    %v56 = vadd.f32 %v54, %v55
    %v57 = vsel %vm26, %v49, 0.0
    %v58 = vsel %vm27, %v56, 0.0
    %v59 = vmax.f32 %v32, %v34
    %v60 = vmax.f32 %v33, %v35
    %v61 = vmin.f32 %v32, %v34
    %v62 = vmin.f32 %v33, %v35
    %v65 = vrot.slane %v59, 6
    %v66 = vrot.slane %v60, 6
    %v69 = vsub.f32 %v61, %v65
    %v70 = vsub.f32 %v62, %v66
    %v71 = vmax.f32 %v69, 0.0
    %v72 = vmax.f32 %v70, 0.0
    %v75 = vrot.slane %v71, 1
    %v76 = vrot.slane %v72, 1
    %v79 = vmul.f32 %v71, %v75
    %v80 = vmul.f32 %v72, %v76
    %v83 = vrot.slane %v32, 6
    %v84 = vrot.slane %v33, 6
    %v87 = vsub.f32 %v32, %v83
    %v88 = vsub.f32 %v33, %v84
    %v91 = vrot.slane %v87, 1
    %v92 = vrot.slane %v88, 1
    %v95 = vmul.f32 %v87, %v91
    %v96 = vmul.f32 %v88, %v92
    %v99 = vrot.slane %v34, 6
    %v100 = vrot.slane %v35, 6
    %v103 = vsub.f32 %v34, %v99
    %v104 = vsub.f32 %v35, %v100
    %v107 = vrot.slane %v103, 1
    %v108 = vrot.slane %v104, 1
    %v111 = vmul.f32 %v103, %v107
    %v112 = vmul.f32 %v104, %v108
    %v113 = vadd.f32 %v95, %v111
    %v114 = vadd.f32 %v96, %v112
    %v115 = vsub.f32 %v113, %v79
    %v116 = vsub.f32 %v114, %v80
    %v117 = vadd.f32 %v115, 1e-10
    %v118 = vadd.f32 %v116, 1e-10
    %v119 = vrcp.pop %v117
    %v120 = vrcp.pop %v118
    %v121 = vmul.f32 %v79, %v119
    %v122 = vmul.f32 %v80, %v120
    %v125 = vrot.slane %v61, 6
    %v126 = vrot.slane %v62, 6
    %v129 = vsub.f32 %v59, %v125
    %v130 = vsub.f32 %v60, %v126
    %v133 = vrot.slane %v129, 1
    %v134 = vrot.slane %v130, 1
    %v137 = vmul.f32 %v129, %v133
    %v138 = vmul.f32 %v130, %v134
    %v139 = vadd.f32 %v137, 1e-10
    %v140 = vadd.f32 %v138, 1e-10
    %v141 = vsub.f32 %v139, %v117
    %v142 = vsub.f32 %v140, %v118
    %v143 = vrcp.pop %v139
    %v144 = vrcp.pop %v140
    %v145 = vmul.f32 %v141, %v143
    %v146 = vmul.f32 %v142, %v144
    %v147 = vsub.f32 %v121, %v145
    %v148 = vsub.f32 %v122, %v146
    %v149 = vsub.f32 1.0, %v147
    %v150 = vsub.f32 1.0, %v148
    %v153 = vperm.slane %v36, 0
    %v154 = vperm.slane %v37, 0
    %v157 = vmul.f32 %v149, %v153
    %v158 = vmul.f32 %v150, %v154
    %161 = vst [vmem:[#allocation1] sm:$0xff] %v157
    %s162 = scalar_lea.vmem [#allocation1], 2
    %v163 = vld [vmem:[%s162] ss:$9 sm:$0xff]
    %164 = vst [vmem:[#allocation1] sm:$0xff] %v158
    %v165 = vld [vmem:[%s162] ss:$9 sm:$0xff]
    %v168 = vsel %vm26, %v163, 0.0
    %v169 = vsel %vm27, %v165, 0.0
    %v170 = vld [vmem:[%s2] sm:$0x3]
    %v171 = vsub.f32 %v170, %v34
    %v172 = vsub.f32 %v170, %v35
    %v173 = vmax.f32 %v171, 0.0
    %v174 = vmax.f32 %v172, 0.0
    %v175 = vmin.f32 %v173, 6.99
    %v176 = vmin.f32 %v174, 6.99
    %v178 = vrot.slane %v170, 6
    %v180 = vsub.f32 %v34, %v178
    %v181 = vsub.f32 %v35, %v178
    %v182 = vmax.f32 %v180, 0.0
    %v183 = vmax.f32 %v181, 0.0
    %v184 = vmin.f32 %v182, 6.99
    %v185 = vmin.f32 %v183, 6.99
    %v186 = vld [vmem:[%s0] sm:$0xff]
    %v187 = vld [vmem:[%s0 + $0x8] sm:$0xff]
    %v188 = vld [vmem:[%s0 + $0x10] sm:$0xff]
    %v189 = vld [vmem:[%s0 + $0x18] sm:$0xff]
    %v190 = vld [vmem:[%s0 + $0x20] sm:$0xff]
    %v191 = vld [vmem:[%s0 + $0x28] sm:$0xff]
    %v192 = vld [vmem:[%s0 + $0x30] sm:$0xff]
    %v193 = vld [vmem:[%s0 + $0x38] sm:$0xff]
    %v194 = vlaneseq
    %v195 = vshrl.u32 %v194, 7
    %v196 = vcvt.f32.s32.to.zero.pseudo %v175
    %v197 = vcvt.f32.s32.to.zero.pseudo %v176
    %v198 = vadd.s32 %v196, 1
    %v199 = vadd.s32 %v197, 1
    %v200 = vcvt.s32.f32 %v198
    %v201 = vcvt.s32.f32 %v199
    %v202 = vsub.f32 %v200, %v175
    %v203 = vsub.f32 %v201, %v176
    %v204 = vsub.f32 1.0, %v202
    %v205 = vsub.f32 1.0, %v203
    %vm206 = vcmask 64512
    %v207 = vsel %vm206, %v186, -inf
    %v208 = vrot.slane %v207, 4
    %v209 = vmax.f32 %v207, %v208
    %v210 = vrot.slane %v209, 2
    %v211 = vmax.f32 %v209, %v210
    %v212 = vrot.slane %v211, 1
    %v213 = vmax.f32 %v211, %v212
    %v214 = vsel %vm206, %v190, -inf
    %v215 = vrot.slane %v214, 4
    %v216 = vmax.f32 %v214, %v215
    %v217 = vrot.slane %v216, 2
    %v218 = vmax.f32 %v216, %v217
    %v219 = vrot.slane %v218, 1
    %v220 = vmax.f32 %v218, %v219
    %v221 = vsub.f32 %v186, %v213
    %v222 = vsub.f32 %v190, %v220
    %v223 = vmul.f32 %v221, 1.442695
    %v224 = vpow.pop %v223
    %v225 = vmul.f32 %v222, 1.442695
    %v226 = vpow.pop %v225
    %v227 = vsel %vm206, %v224, 0.0
    %v228 = vrot.slane %v227, 4
    %v229 = vadd.f32 %v227, %v228
    %v230 = vrot.slane %v229, 2
    %v231 = vadd.f32 %v229, %v230
    %v232 = vrot.slane %v231, 1
    %v233 = vadd.f32 %v231, %v232
    %v234 = vsel %vm206, %v226, 0.0
    %v235 = vrot.slane %v234, 4
    %v236 = vadd.f32 %v234, %v235
    %v237 = vrot.slane %v236, 2
    %v238 = vadd.f32 %v236, %v237
    %v239 = vrot.slane %v238, 1
    %v240 = vadd.f32 %v238, %v239
    %v241 = vlog2.pop %v233
    %v242 = vmul.f32 %v241, 0.6931472
    %v243 = vlog2.pop %v240
    %v244 = vmul.f32 %v243, 0.6931472
    %v245 = vadd.f32 %v242, %v213
    %v246 = vadd.f32 %v244, %v220
    %v247 = vperm.slane %v196, 0
    %v248 = vperm.slane %v197, 0
    %vm249 = vcmp.eq.s32.totalorder %v195, %v247
    %vm250 = vcmp.eq.s32.totalorder %v195, %v248
    %v251 = vperm.slane %v202, 0
    %v252 = vperm.slane %v203, 0
    %v253 = vsel %vm249, %v251, 0.0
    %v254 = vsel %vm250, %v252, 0.0
    %v255 = vperm.slane %v198, 0
    %v256 = vperm.slane %v199, 0
    %vm257 = vcmp.eq.s32.totalorder %v195, %v255
    %vm258 = vcmp.eq.s32.totalorder %v195, %v256
    %v259 = vperm.slane %v204, 0
    %v260 = vperm.slane %v205, 0
    %v261 = vsel %vm257, %v259, 0.0
    %v262 = vsel %vm258, %v260, 0.0
    %v263 = vadd.f32 %v253, %v261
    %v264 = vadd.f32 %v254, %v262
    %v265 = vmul.f32 %v186, %v263
    %v266 = vmul.f32 %v190, %v264
    %v267 = vsel %vm206, %v265, 0.0
    %v268 = vrot.slane %v267, 4
    %v269 = vadd.f32 %v267, %v268
    %v270 = vrot.slane %v269, 2
    %v271 = vadd.f32 %v269, %v270
    %v272 = vrot.slane %v271, 1
    %v273 = vadd.f32 %v271, %v272
    %v274 = vsel %vm206, %v266, 0.0
    %v275 = vrot.slane %v274, 4
    %v276 = vadd.f32 %v274, %v275
    %v277 = vrot.slane %v276, 2
    %v278 = vadd.f32 %v276, %v277
    %v279 = vrot.slane %v278, 1
    %v280 = vadd.f32 %v278, %v279
    %v281 = vsub.f32 %v245, %v273
    %v282 = vsub.f32 %v246, %v280
    %v283 = vadd.f32 %v281, 0.0
    %v284 = vadd.f32 %v282, 0.0
    %v285 = vsel %vm206, %v187, -inf
    %v286 = vrot.slane %v285, 4
    %v287 = vmax.f32 %v285, %v286
    %v288 = vrot.slane %v287, 2
    %v289 = vmax.f32 %v287, %v288
    %v290 = vrot.slane %v289, 1
    %v291 = vmax.f32 %v289, %v290
    %v292 = vsel %vm206, %v191, -inf
    %v293 = vrot.slane %v292, 4
    %v294 = vmax.f32 %v292, %v293
    %v295 = vrot.slane %v294, 2
    %v296 = vmax.f32 %v294, %v295
    %v297 = vrot.slane %v296, 1
    %v298 = vmax.f32 %v296, %v297
    %v299 = vsub.f32 %v187, %v291
    %v300 = vsub.f32 %v191, %v298
    %v301 = vmul.f32 %v299, 1.442695
    %v302 = vpow.pop %v301
    %v303 = vmul.f32 %v300, 1.442695
    %v304 = vpow.pop %v303
    %v305 = vsel %vm206, %v302, 0.0
    %v306 = vrot.slane %v305, 4
    %v307 = vadd.f32 %v305, %v306
    %v308 = vrot.slane %v307, 2
    %v309 = vadd.f32 %v307, %v308
    %v310 = vrot.slane %v309, 1
    %v311 = vadd.f32 %v309, %v310
    %v312 = vsel %vm206, %v304, 0.0
    %v313 = vrot.slane %v312, 4
    %v314 = vadd.f32 %v312, %v313
    %v315 = vrot.slane %v314, 2
    %v316 = vadd.f32 %v314, %v315
    %v317 = vrot.slane %v316, 1
    %v318 = vadd.f32 %v316, %v317
    %v319 = vlog2.pop %v311
    %v320 = vmul.f32 %v319, 0.6931472
    %v321 = vlog2.pop %v318
    %v322 = vmul.f32 %v321, 0.6931472
    %v323 = vadd.f32 %v320, %v291
    %v324 = vadd.f32 %v322, %v298
    %v325 = vperm.slane %v196, 1
    %v326 = vperm.slane %v197, 1
    %vm327 = vcmp.eq.s32.totalorder %v195, %v325
    %vm328 = vcmp.eq.s32.totalorder %v195, %v326
    %v329 = vperm.slane %v202, 1
    %v330 = vperm.slane %v203, 1
    %v331 = vsel %vm327, %v329, 0.0
    %v332 = vsel %vm328, %v330, 0.0
    %v333 = vperm.slane %v198, 1
    %v334 = vperm.slane %v199, 1
    %vm335 = vcmp.eq.s32.totalorder %v195, %v333
    %vm336 = vcmp.eq.s32.totalorder %v195, %v334
    %v337 = vperm.slane %v204, 1
    %v338 = vperm.slane %v205, 1
    %v339 = vsel %vm335, %v337, 0.0
    %v340 = vsel %vm336, %v338, 0.0
    %v341 = vadd.f32 %v331, %v339
    %v342 = vadd.f32 %v332, %v340
    %v343 = vmul.f32 %v187, %v341
    %v344 = vmul.f32 %v191, %v342
    %v345 = vsel %vm206, %v343, 0.0
    %v346 = vrot.slane %v345, 4
    %v347 = vadd.f32 %v345, %v346
    %v348 = vrot.slane %v347, 2
    %v349 = vadd.f32 %v347, %v348
    %v350 = vrot.slane %v349, 1
    %v351 = vadd.f32 %v349, %v350
    %v352 = vsel %vm206, %v344, 0.0
    %v353 = vrot.slane %v352, 4
    %v354 = vadd.f32 %v352, %v353
    %v355 = vrot.slane %v354, 2
    %v356 = vadd.f32 %v354, %v355
    %v357 = vrot.slane %v356, 1
    %v358 = vadd.f32 %v356, %v357
    %v359 = vsub.f32 %v323, %v351
    %v360 = vsub.f32 %v324, %v358
    %v361 = vadd.f32 %v283, %v359
    %v362 = vadd.f32 %v284, %v360
    %v363 = vcvt.f32.s32.to.zero.pseudo %v184
    %v364 = vcvt.f32.s32.to.zero.pseudo %v185
    %v365 = vadd.s32 %v363, 1
    %v366 = vadd.s32 %v364, 1
    %v367 = vcvt.s32.f32 %v365
    %v368 = vcvt.s32.f32 %v366
    %v369 = vsub.f32 %v367, %v184
    %v370 = vsub.f32 %v368, %v185
    %v371 = vsub.f32 1.0, %v369
    %v372 = vsub.f32 1.0, %v370
    %v373 = vsel %vm206, %v188, -inf
    %v374 = vrot.slane %v373, 4
    %v375 = vmax.f32 %v373, %v374
    %v376 = vrot.slane %v375, 2
    %v377 = vmax.f32 %v375, %v376
    %v378 = vrot.slane %v377, 1
    %v379 = vmax.f32 %v377, %v378
    %v380 = vsel %vm206, %v192, -inf
    %v381 = vrot.slane %v380, 4
    %v382 = vmax.f32 %v380, %v381
    %v383 = vrot.slane %v382, 2
    %v384 = vmax.f32 %v382, %v383
    %v385 = vrot.slane %v384, 1
    %v386 = vmax.f32 %v384, %v385
    %v387 = vsub.f32 %v188, %v379
    %v388 = vsub.f32 %v192, %v386
    %v389 = vmul.f32 %v387, 1.442695
    %v390 = vpow.pop %v389
    %v391 = vmul.f32 %v388, 1.442695
    %v392 = vpow.pop %v391
    %v393 = vsel %vm206, %v390, 0.0
    %v394 = vrot.slane %v393, 4
    %v395 = vadd.f32 %v393, %v394
    %v396 = vrot.slane %v395, 2
    %v397 = vadd.f32 %v395, %v396
    %v398 = vrot.slane %v397, 1
    %v399 = vadd.f32 %v397, %v398
    %v400 = vsel %vm206, %v392, 0.0
    %v401 = vrot.slane %v400, 4
    %v402 = vadd.f32 %v400, %v401
    %v403 = vrot.slane %v402, 2
    %v404 = vadd.f32 %v402, %v403
    %v405 = vrot.slane %v404, 1
    %v406 = vadd.f32 %v404, %v405
    %v407 = vlog2.pop %v399
    %v408 = vmul.f32 %v407, 0.6931472
    %v409 = vlog2.pop %v406
    %v410 = vmul.f32 %v409, 0.6931472
    %v411 = vadd.f32 %v408, %v379
    %v412 = vadd.f32 %v410, %v386
    %v413 = vperm.slane %v363, 2
    %v414 = vperm.slane %v364, 2
    %vm415 = vcmp.eq.s32.totalorder %v195, %v413
    %vm416 = vcmp.eq.s32.totalorder %v195, %v414
    %v417 = vperm.slane %v369, 2
    %v418 = vperm.slane %v370, 2
    %v419 = vsel %vm415, %v417, 0.0
    %v420 = vsel %vm416, %v418, 0.0
    %v421 = vperm.slane %v365, 2
    %v422 = vperm.slane %v366, 2
    %vm423 = vcmp.eq.s32.totalorder %v195, %v421
    %vm424 = vcmp.eq.s32.totalorder %v195, %v422
    %v425 = vperm.slane %v371, 2
    %v426 = vperm.slane %v372, 2
    %v427 = vsel %vm423, %v425, 0.0
    %v428 = vsel %vm424, %v426, 0.0
    %v429 = vadd.f32 %v419, %v427
    %v430 = vadd.f32 %v420, %v428
    %v431 = vmul.f32 %v188, %v429
    %v432 = vmul.f32 %v192, %v430
    %v433 = vsel %vm206, %v431, 0.0
    %v434 = vrot.slane %v433, 4
    %v435 = vadd.f32 %v433, %v434
    %v436 = vrot.slane %v435, 2
    %v437 = vadd.f32 %v435, %v436
    %v438 = vrot.slane %v437, 1
    %v439 = vadd.f32 %v437, %v438
    %v440 = vsel %vm206, %v432, 0.0
    %v441 = vrot.slane %v440, 4
    %v442 = vadd.f32 %v440, %v441
    %v443 = vrot.slane %v442, 2
    %v444 = vadd.f32 %v442, %v443
    %v445 = vrot.slane %v444, 1
    %v446 = vadd.f32 %v444, %v445
    %v447 = vsub.f32 %v411, %v439
    %v448 = vsub.f32 %v412, %v446
    %v449 = vadd.f32 %v361, %v447
    %v450 = vadd.f32 %v362, %v448
    %v451 = vsel %vm206, %v189, -inf
    %v452 = vrot.slane %v451, 4
    %v453 = vmax.f32 %v451, %v452
    %v454 = vrot.slane %v453, 2
    %v455 = vmax.f32 %v453, %v454
    %v456 = vrot.slane %v455, 1
    %v457 = vmax.f32 %v455, %v456
    %v458 = vsel %vm206, %v193, -inf
    %v459 = vrot.slane %v458, 4
    %v460 = vmax.f32 %v458, %v459
    %v461 = vrot.slane %v460, 2
    %v462 = vmax.f32 %v460, %v461
    %v463 = vrot.slane %v462, 1
    %v464 = vmax.f32 %v462, %v463
    %v465 = vsub.f32 %v189, %v457
    %v466 = vsub.f32 %v193, %v464
    %v467 = vmul.f32 %v465, 1.442695
    %v468 = vpow.pop %v467
    %v469 = vmul.f32 %v466, 1.442695
    %v470 = vpow.pop %v469
    %v471 = vsel %vm206, %v468, 0.0
    %v472 = vrot.slane %v471, 4
    %v473 = vadd.f32 %v471, %v472
    %v474 = vrot.slane %v473, 2
    %v475 = vadd.f32 %v473, %v474
    %v476 = vrot.slane %v475, 1
    %v477 = vadd.f32 %v475, %v476
    %v478 = vsel %vm206, %v470, 0.0
    %v479 = vrot.slane %v478, 4
    %v480 = vadd.f32 %v478, %v479
    %v481 = vrot.slane %v480, 2
    %v482 = vadd.f32 %v480, %v481
    %v483 = vrot.slane %v482, 1
    %v484 = vadd.f32 %v482, %v483
    %v485 = vlog2.pop %v477
    %v486 = vmul.f32 %v485, 0.6931472
    %v487 = vlog2.pop %v484
    %v488 = vmul.f32 %v487, 0.6931472
    %v489 = vadd.f32 %v486, %v457
    %v490 = vadd.f32 %v488, %v464
    %v491 = vperm.slane %v363, 3
    %v492 = vperm.slane %v364, 3
    %vm493 = vcmp.eq.s32.totalorder %v195, %v491
    %vm494 = vcmp.eq.s32.totalorder %v195, %v492
    %v495 = vperm.slane %v369, 3
    %v496 = vperm.slane %v370, 3
    %v497 = vsel %vm493, %v495, 0.0
    %v498 = vsel %vm494, %v496, 0.0
    %v499 = vperm.slane %v365, 3
    %v500 = vperm.slane %v366, 3
    %vm501 = vcmp.eq.s32.totalorder %v195, %v499
    %vm502 = vcmp.eq.s32.totalorder %v195, %v500
    %v503 = vperm.slane %v371, 3
    %v504 = vperm.slane %v372, 3
    %v505 = vsel %vm501, %v503, 0.0
    %v506 = vsel %vm502, %v504, 0.0
    %v507 = vadd.f32 %v497, %v505
    %v508 = vadd.f32 %v498, %v506
    %v509 = vmul.f32 %v189, %v507
    %v510 = vmul.f32 %v193, %v508
    %v511 = vsel %vm206, %v509, 0.0
    %v512 = vrot.slane %v511, 4
    %v513 = vadd.f32 %v511, %v512
    %v514 = vrot.slane %v513, 2
    %v515 = vadd.f32 %v513, %v514
    %v516 = vrot.slane %v515, 1
    %v517 = vadd.f32 %v515, %v516
    %v518 = vsel %vm206, %v510, 0.0
    %v519 = vrot.slane %v518, 4
    %v520 = vadd.f32 %v518, %v519
    %v521 = vrot.slane %v520, 2
    %v522 = vadd.f32 %v520, %v521
    %v523 = vrot.slane %v522, 1
    %v524 = vadd.f32 %v522, %v523
    %v525 = vsub.f32 %v489, %v517
    %v526 = vsub.f32 %v490, %v524
    %v527 = vadd.f32 %v449, %v525
    %v528 = vadd.f32 %v450, %v526
    %v529 = vmul.f32 %v527, 0.25
    %v530 = vmul.f32 %v528, 0.25
    %v531 = vmul.f32 %v529, %v36
    %v532 = vmul.f32 %v530, %v37
    %v533 = vsel %vm26, %v531, 0.0
    %v534 = vsel %vm27, %v532, 0.0
    %vm535 = vcmask 57344
    %v536 = vsel %vm535, %v57, 0.0
    %v537 = vsel %vm535, %v58, 0.0
    %v538 = vadd.f32 %v536, %v537
    %v539 = vsel %vm535, %v168, 0.0
    %v540 = vsel %vm535, %v169, 0.0
    %v541 = vadd.f32 %v539, %v540
    %v542 = vsel %vm535, %v533, 0.0
    %v543 = vsel %vm535, %v534, 0.0
    %v544 = vadd.f32 %v542, %v543
    %v545 = vsel %vm535, %v30, 0.0
    %v546 = vsel %vm535, %v31, 0.0
    %v547 = vadd.f32 %v545, %v546
    %v549 = vrot.slane %v541, 7
    %v552 = vrot.slane %v544, 6
    %v555 = vrot.slane %v547, 5
    %vm557 = vcmask 1040384
    %v558 = vsel %vm557, %v538, %v549
    %vm559 = vcmask 1041408
    %v560 = vsel %vm559, %v558, %v552
    %vm561 = vcmask 1042432
    %v562 = vsel %vm561, %v560, %v555
    %563 = vst.msk [vmem:[#allocation2] sm:$0xf] %vm42, %v562
    // Predicated region
    $region26: #{tpu_custom_call.1} parent=1 // pred_check
      _
    $region27: #{tpu_custom_call.1} parent=1 // pred_check_branch
      %565 = sbr.rel (0) target = $region29
    $region28: #{tpu_custom_call.1} parent=1 // pred_region
      %567 = vsyncadd [#allocation3], 0
      %s569 = sshll.u32 [#allocation2], 4
      %s570 = int_to_ptr.vmem [resolvable:$true] %s569
      %s571 = sshll.u32 %s6, 4
      %s572 = int_to_ptr.hbm [resolvable:$true] %s571
      %574 = dma.vmem_to_hbm [thread:$0]  %s570, 64, %s572, [#allocation3]
    $region29: #{tpu_custom_call.1} parent=1 // pred_fallthru
      _
    // Predicated region
    $region30: #{tpu_custom_call.1} parent=1 // pred_check
      _
    $region31: #{tpu_custom_call.1} parent=1 // pred_check_branch
      %576 = sbr.rel (0) target = $region33
    $region32: #{tpu_custom_call.1} parent=1 // pred_region
      %578 = dma.done [#allocation3], 64
    $region33: #{tpu_custom_call.1} parent=1 // pred_fallthru
      _
    %579 = vsyncpa [#allocation3], 1

</llo_original>
